<compile_context>
chip_gen: v7x
topology: tpu7x:2x2x1
jax: 0.10.0
libtpu: 0.0.40
codegen_flags: <defaults>
</compile_context>

<pallas_src>
import math

import jax
import jax.numpy as jnp
from jax.experimental import pallas as pl
from jax.experimental.pallas import tpu as pltpu


def _inner_cell_kernel(x_ref, w1_ref, b1_ref, w2_ref, b2_ref, o_ref, h_ref):
    j = pl.program_id(1)

    # First linear + ReLU: computed once per batch tile, cached in VMEM scratch.
    @pl.when(j == 0)
    def _():
        h = jnp.dot(x_ref[...], w1_ref[...], preferred_element_type=jnp.float32)
        h = jnp.maximum(h + b1_ref[...], 0.0)
        # Intentional mixed precision: re-cast ReLU activations to bf16 so the
        # second matmul also runs at bf16 MXU throughput (f32 accumulation kept).
        h_ref[...] = h.astype(h_ref.dtype)

    # Second linear on the current column tile of w2.
    out = jnp.dot(h_ref[...], w2_ref[...], preferred_element_type=jnp.float32)
    o_ref[...] = (out + b2_ref[...]).astype(o_ref.dtype)


def _round_up(n, m):
    return ((n + m - 1) // m) * m


def _choose_col_tile(H, out_dim, max_w2_tile_bytes=8 << 20):
    """Largest power-of-two-split column tile (multiple of 128, divides out_dim)
    whose bf16 w2 slab fits the per-tile budget."""
    if out_dim % 128 != 0:
        return out_dim                      # can't lane-tile cleanly; keep whole
    tn = out_dim
    while tn % 256 == 0 and H * tn * 2 > max_w2_tile_bytes:
        tn //= 2
    return tn


def inner_cell_forward(x, w1, b1, w2, b2, *, batch_tile=256):
    """x: (B, input_size); w1: (input_size, H); b1: (H,); w2: (H, 4H); b2: (4H,).

    Weights are stored transposed vs. PyTorch (in, out) so the kernel does
    plain row-major matmuls.
    """
    B, in_dim = x.shape
    H = w1.shape[1]
    out_dim = w2.shape[1]
    assert out_dim == 4 * H
    out_dtype = x.dtype
    out_itemsize = jnp.dtype(out_dtype).itemsize

    # ---- batch tiling / padding (keeps every tile full, stores unmasked) ----
    if B >= batch_tile:
        TB = batch_tile
    else:
        TB = _round_up(B, 16)            # bf16 sublane packing = 16 rows
    B_pad = _round_up(B, TB)
    if B_pad != B:
        x = jnp.pad(x, ((0, B_pad - B), (0, 0)))

    # ---- output-column tiling (lane-dense, divides out_dim) ----
    TN = _choose_col_tile(H, out_dim)
    grid = (B_pad // TB, out_dim // TN)

    # ---- dtypes: bf16 MXU operands, f32 biases / accumulation / output ----
    x_bf = x.astype(jnp.bfloat16)
    w1_bf = w1.astype(jnp.bfloat16)
    w2_bf = w2.astype(jnp.bfloat16)
    b1_2d = b1.reshape(1, H).astype(jnp.float32)
    b2_2d = b2.reshape(1, out_dim).astype(jnp.float32)

    # ---- explicit VMEM budget from the actual (double-buffered) tiles ----
    buffered = (TB * in_dim * 2            # x tile (bf16)
                + in_dim * H * 2           # w1 (bf16, resident)
                + H * 4                    # b1 (f32)
                + H * TN * 2               # w2 column tile (bf16)
                + TN * 4                   # b2 column tile (f32)
                + TB * TN * out_itemsize)  # out tile
    vmem_need = 2 * buffered + TB * H * 2  # x2 double-buffer + h scratch
    vmem_limit = int(min(64 * 1024 * 1024,               # <= v7x physical VMEM
                         vmem_need + 4 * 1024 * 1024))   # headroom
    # TODO(synk): for in_dim*H too large for w1 to stay VMEM-resident, add a
    # K-reduction grid axis over in_dim with an f32 accumulator scratch.

    flops = 2 * B_pad * (in_dim * H + H * out_dim)
    bytes_accessed = (x_bf.size * 2 + w1_bf.size * 2 + b1_2d.size * 4
                      + (w2_bf.size * 2 + b2_2d.size * 4) * (B_pad // TB)
                      + B_pad * out_dim * out_itemsize)

    out = pl.pallas_call(
        _inner_cell_kernel,
        out_shape=jax.ShapeDtypeStruct((B_pad, out_dim), out_dtype),
        grid_spec=pltpu.PrefetchScalarGridSpec(
            num_scalar_prefetch=0,
            grid=grid,
            in_specs=[
                pl.BlockSpec((TB, in_dim), lambda i, j: (i, 0)),   # x: row-tiled
                pl.BlockSpec(w1_bf.shape, lambda i, j: (0, 0)),    # w1 resident
                pl.BlockSpec(b1_2d.shape, lambda i, j: (0, 0)),    # b1 resident
                pl.BlockSpec((H, TN), lambda i, j: (0, j)),        # w2: col-tiled
                pl.BlockSpec((1, TN), lambda i, j: (0, j)),        # b2: col-tiled
            ],
            out_specs=pl.BlockSpec((TB, TN), lambda i, j: (i, j)),
            scratch_shapes=[pltpu.VMEM((TB, H), jnp.bfloat16)],    # cached ReLU(h)
        ),
        compiler_params=pltpu.CompilerParams(
            dimension_semantics=("parallel", "arbitrary"),
            vmem_limit_bytes=vmem_limit,
        ),
        cost_estimate=pl.CostEstimate(
            flops=flops, transcendentals=0, bytes_accessed=bytes_accessed),
    )(x_bf, w1_bf, b1_2d, w2_bf, b2_2d)

    return out[:B] if B_pad != B else out


def init_inner_cell_params(key, input_size, hidden_size, dtype=jnp.float32):
    """Deterministic init matching nn.Linear's default U(-1/sqrt(fan_in), +)."""
    k1, k2, k3, k4 = jax.random.split(key, 4)
    bound1 = 1.0 / math.sqrt(input_size)
    bound2 = 1.0 / math.sqrt(hidden_size)
    w1 = jax.random.uniform(k1, (input_size, hidden_size), dtype,
                            minval=-bound1, maxval=bound1)
    b1 = jax.random.uniform(k2, (hidden_size,), dtype,
                            minval=-bound1, maxval=bound1)
    w2 = jax.random.uniform(k3, (hidden_size, 4 * hidden_size), dtype,
                            minval=-bound2, maxval=bound2)
    b2 = jax.random.uniform(k4, (4 * hidden_size,), dtype,
                            minval=-bound2, maxval=bound2)
    return w1, b1, w2, b2


if __name__ == "__main__":
    key = jax.random.PRNGKey(0)
    batch, input_size, hidden_size = 8, 16, 32

    kx, kp = jax.random.split(key)
    x = jax.random.normal(kx, (batch, input_size), jnp.float32)
    w1, b1, w2, b2 = init_inner_cell_params(kp, input_size, hidden_size)

    out = inner_cell_forward(x, w1, b1, w2, b2)
    out = jax.block_until_ready(out)
    assert out.shape == (batch, 4 * hidden_size)

    # Reference 1: emulate the kernel's mixed-precision path (tight check).
    h_ref = jnp.maximum(
        jnp.dot(x.astype(jnp.bfloat16), w1.astype(jnp.bfloat16),
                preferred_element_type=jnp.float32) + b1, 0.0)
    ref_mixed = jnp.dot(h_ref.astype(jnp.bfloat16), w2.astype(jnp.bfloat16),
                        preferred_element_type=jnp.float32) + b2
    assert jnp.allclose(out, ref_mixed, atol=2e-3, rtol=2e-3)

    # Reference 2: full-f32 torch-equivalent forward (loose, bf16 rounding).
    ref_f32 = jnp.maximum(x @ w1 + b1, 0.0) @ w2 + b2
    assert jnp.allclose(out, ref_f32, atol=5e-2, rtol=5e-2)

    print("KERNEL_OK")
</pallas_src>

<mosaic_0001>
module attributes {stable_mosaic.version = 11 : i64} {
  func.func @_inner_cell_kernel(%arg0: i32, %arg1: i32, %arg2: memref<16x16xbf16, #tpu.memory_space<vmem>>, %arg3: memref<16x32xbf16, #tpu.memory_space<vmem>>, %arg4: memref<1x32xf32, #tpu.memory_space<vmem>>, %arg5: memref<32x128xbf16, #tpu.memory_space<vmem>>, %arg6: memref<1x128xf32, #tpu.memory_space<vmem>>, %arg7: memref<16x128xf32, #tpu.memory_space<vmem>>, %arg8: memref<16x32xbf16, #tpu.memory_space<vmem>>) attributes {dimension_semantics = [#tpu.dimension_semantics<parallel>, #tpu.dimension_semantics<arbitrary>], iteration_bounds = array<i64: 1, 1>, scalar_prefetch = 0 : i64, scratch_operands = 1 : i64, tpu.core_type = #tpu.core_type<tc>, window_params = [{transform_indices = @transform_0, window_bounds = array<i64: 16, 16>}, {pipeline_mode = #tpu.pipeline_mode<synchronous>, transform_indices = @transform_1, window_bounds = array<i64: 16, 32>}, {pipeline_mode = #tpu.pipeline_mode<synchronous>, transform_indices = @transform_2, window_bounds = array<i64: 1, 32>}, {transform_indices = @transform_3, window_bounds = array<i64: 32, 128>}, {transform_indices = @transform_4, window_bounds = array<i64: 1, 128>}, {transform_indices = @transform_5, window_bounds = array<i64: 16, 128>}]} {
    %c0_i32 = arith.constant 0 : i32
    %0 = arith.cmpi eq, %arg1, %c0_i32 : i32
    %1 = arith.extui %0 : i1 to i32
    %c0_i32_0 = arith.constant 0 : i32
    %2 = arith.cmpi ne, %1, %c0_i32_0 : i32
    scf.if %2 {
      %c0_8 = arith.constant 0 : index
      %c0_9 = arith.constant 0 : index
      %10 = vector.load %arg2[%c0_8, %c0_9] : memref<16x16xbf16, #tpu.memory_space<vmem>>, vector<16x16xbf16>
      %c0_10 = arith.constant 0 : index
      %c0_11 = arith.constant 0 : index
      %11 = vector.load %arg3[%c0_10, %c0_11] : memref<16x32xbf16, #tpu.memory_space<vmem>>, vector<16x32xbf16>
      %cst_12 = arith.constant dense<0.000000e+00> : vector<16x32xf32>
      %12 = tpu.matmul %10, %11, %cst_12 {dimension_numbers = #tpu.dot_dimension_numbers<[1], [0], [0], [1], [0, 0, 1, 1], [], []>} : vector<16x16xbf16>, vector<16x32xbf16>, vector<16x32xf32> -> vector<16x32xf32>
      %c0_13 = arith.constant 0 : index
      %c0_14 = arith.constant 0 : index
      %13 = vector.load %arg4[%c0_13, %c0_14] : memref<1x32xf32, #tpu.memory_space<vmem>>, vector<1x32xf32>
      %14 = vector.broadcast %13 : vector<1x32xf32> to vector<16x32xf32>
      %15 = arith.addf %12, %14 : vector<16x32xf32>
      %cst_15 = arith.constant 0.000000e+00 : f32
      %16 = vector.broadcast %cst_15 : f32 to vector<16x32xf32>
      %17 = arith.maximumf %15, %16 : vector<16x32xf32>
      %18 = arith.truncf %17 : vector<16x32xf32> to vector<16x32xbf16>
      %c0_16 = arith.constant 0 : index
      %c0_17 = arith.constant 0 : index
      %19 = vector.load %arg8[%c0_16, %c0_17] : memref<16x32xbf16, #tpu.memory_space<vmem>>, vector<16x32xbf16>
      tpu.vector_store %arg8[%c0_16, %c0_17], %18 {strides = array<i32>} : memref<16x32xbf16, #tpu.memory_space<vmem>>, vector<16x32xbf16>,
    } else {
    }
    %c0 = arith.constant 0 : index
    %c0_1 = arith.constant 0 : index
    %3 = vector.load %arg8[%c0, %c0_1] : memref<16x32xbf16, #tpu.memory_space<vmem>>, vector<16x32xbf16>
    %c0_2 = arith.constant 0 : index
    %c0_3 = arith.constant 0 : index
    %4 = vector.load %arg5[%c0_2, %c0_3] : memref<32x128xbf16, #tpu.memory_space<vmem>>, vector<32x128xbf16>
    %cst = arith.constant dense<0.000000e+00> : vector<16x128xf32>
    %5 = tpu.matmul %3, %4, %cst {dimension_numbers = #tpu.dot_dimension_numbers<[1], [0], [0], [1], [0, 0, 1, 1], [], []>} : vector<16x32xbf16>, vector<32x128xbf16>, vector<16x128xf32> -> vector<16x128xf32>
    %c0_4 = arith.constant 0 : index
    %c0_5 = arith.constant 0 : index
    %6 = vector.load %arg6[%c0_4, %c0_5] : memref<1x128xf32, #tpu.memory_space<vmem>>, vector<1x128xf32>
    %7 = vector.broadcast %6 : vector<1x128xf32> to vector<16x128xf32>
    %8 = arith.addf %5, %7 : vector<16x128xf32>
    %c0_6 = arith.constant 0 : index
    %c0_7 = arith.constant 0 : index
    %9 = vector.load %arg7[%c0_6, %c0_7] : memref<16x128xf32, #tpu.memory_space<vmem>>, vector<16x128xf32>
    tpu.vector_store %arg7[%c0_6, %c0_7], %8 {strides = array<i32>} : memref<16x128xf32, #tpu.memory_space<vmem>>, vector<16x128xf32>,
    return
  }
  func.func @transform_0(%arg0: i32, %arg1: i32) -> (i32, i32) {
    %c0_i32 = arith.constant 0 : i32
    %c0_i32_0 = arith.constant 0 : i32
    return %arg0, %c0_i32 : i32, i32
  }
  func.func @transform_1(%arg0: i32, %arg1: i32) -> (i32, i32) {
    %c0_i32 = arith.constant 0 : i32
    %c0_i32_0 = arith.constant 0 : i32
    %c0_i32_1 = arith.constant 0 : i32
    return %c0_i32, %c0_i32_0 : i32, i32
  }
  func.func @transform_2(%arg0: i32, %arg1: i32) -> (i32, i32) {
    %c0_i32 = arith.constant 0 : i32
    %c0_i32_0 = arith.constant 0 : i32
    %c0_i32_1 = arith.constant 0 : i32
    return %c0_i32, %c0_i32_0 : i32, i32
  }
  func.func @transform_3(%arg0: i32, %arg1: i32) -> (i32, i32) {
    %c0_i32 = arith.constant 0 : i32
    %c0_i32_0 = arith.constant 0 : i32
    return %c0_i32, %arg1 : i32, i32
  }
  func.func @transform_4(%arg0: i32, %arg1: i32) -> (i32, i32) {
    %c0_i32 = arith.constant 0 : i32
    %c0_i32_0 = arith.constant 0 : i32
    return %c0_i32, %arg1 : i32, i32
  }
  func.func @transform_5(%arg0: i32, %arg1: i32) -> (i32, i32) {
    %c0_i32 = arith.constant 0 : i32
    return %arg0, %arg1 : i32, i32
  }
}

</mosaic_0001>

<llo_original>
// kernel: tpu_custom_call.1
$region0: #{tpu_custom_call.1}
  #allocation0 [shape = 'u32[]', space=smem, size = 0x4, offset = 0x4, fixed_abs, tag = 'smem constant byte address 0x4 - core index']
  #allocation1 [shape = 'u32[144,128]{1,0:T(1,128)}', space=vmem, size = 0x12000, scoped, tag = 'internal scratch']
  #allocation2 [shape = 'bf16[16,32]{1,0:T(16,128)(2,1)}', space=vmem, size = 0x1000, scoped, tag = 'scratch operand']
  %s0 = inlined_call_operand.hbm [shape: bf16[16,16], index: 0, kind: input, shape index: {}]
  %s1 = inlined_call_operand.hbm [shape: bf16[16,32], index: 1, kind: input, shape index: {}]
  %s2 = inlined_call_operand.vmem [shape: f32[1,32], index: 2, kind: input, shape index: {}]
  %s3 = inlined_call_operand.hbm [shape: bf16[32,128], index: 3, kind: input, shape index: {}]
  %s4 = inlined_call_operand.vmem [shape: f32[1,128], index: 4, kind: input, shape index: {}]
  %s5 = inlined_call_operand.hbm [shape: f32[16,128], index: 5, kind: output, shape index: {}]
  %s6 = sld [smem:[#allocation0]]
  $region46: #{tpu_custom_call.1} parent=0
    _
  %s8 = ssub.s32 1, %s6
  %s9 = scalar_select 0, %s8, %s6
  $region1: #{tpu_custom_call.1} parent=0
    #allocation3 [shape = 'u8[4096]{0}', space=vmem, size = 0x1000, scoped, tag = 'input window, operand 0, single buffered']
    #allocation4 [shape = 's32[1]{0}', space=sflag, size = 0x4, scoped, tag = 'scoped memory for tpu_custom_call.1']
    #allocation5 [shape = 's32[1]{0}', space=sflag, size = 0x4, scoped, tag = 'scoped memory for tpu_custom_call.1']
    #allocation6 [shape = 'u8[4096]{0}', space=vmem, size = 0x1000, scoped, tag = 'input window, operand 1, single buffered']
    #allocation7 [shape = 's32[1]{0}', space=sflag, size = 0x4, scoped, tag = 'scoped memory for tpu_custom_call.1']
    #allocation8 [shape = 'u8[8192]{0}', space=vmem, size = 0x2000, scoped, tag = 'input window, operand 3, single buffered']
    #allocation9 [shape = 'u8[8192]{0}', space=vmem, size = 0x2000, scoped, tag = 'output window, operand 0, single buffered']
    %10 = vsyncpa [#allocation4], 0
    %11 = vsyncpa [#allocation7], 0
    %12 = vsyncpa [#allocation5], 0
    // Predicated region
    $region2: #{tpu_custom_call.1} parent=1 // pred_check
      _
    $region3: #{tpu_custom_call.1} parent=1 // pred_check_branch
      %14 = sbr.rel (0) target = $region5
    $region4: #{tpu_custom_call.1} parent=1 // pred_region
      %s16 = ssub.s32 128, 128
      %17 = vsyncadd [#allocation4], %s16
      %s18 = sshll.u32 [#allocation3], 4
      %s19 = int_to_ptr.vmem [resolvable:$true] %s18
      %24 = dma.hbm_to_vmem [thread:$0]  %s0, 128, %s19, [#allocation4], 64, 64, 4
    $region5: #{tpu_custom_call.1} parent=1 // pred_fallthru
      _
    // Predicated region
    $region6: #{tpu_custom_call.1} parent=1 // pred_check
      _
    $region7: #{tpu_custom_call.1} parent=1 // pred_check_branch
      %26 = sbr.rel (0) target = $region9
    $region8: #{tpu_custom_call.1} parent=1 // pred_region
      %s28 = ssub.s32 128, 128
      %29 = vsyncadd [#allocation7], %s28
      %s30 = sshll.u32 [#allocation6], 4
      %s31 = int_to_ptr.vmem [resolvable:$true] %s30
      %36 = dma.hbm_to_vmem [thread:$0]  %s1, 128, %s31, [#allocation7], 64, 64, 4
    $region9: #{tpu_custom_call.1} parent=1 // pred_fallthru
      _
    // Predicated region
    $region10: #{tpu_custom_call.1} parent=1 // pred_check
      _
    $region11: #{tpu_custom_call.1} parent=1 // pred_check_branch
      %38 = sbr.rel (0) target = $region13
    $region12: #{tpu_custom_call.1} parent=1 // pred_region
      _
    $region13: #{tpu_custom_call.1} parent=1 // pred_fallthru
      _
    // Predicated region
    $region14: #{tpu_custom_call.1} parent=1 // pred_check
      _
    $region15: #{tpu_custom_call.1} parent=1 // pred_check_branch
      %40 = sbr.rel (0) target = $region17
    $region16: #{tpu_custom_call.1} parent=1 // pred_region
      %s42 = ssub.s32 256, 256
      %43 = vsyncadd [#allocation7], %s42
      %s44 = sshll.u32 [#allocation8], 4
      %s45 = int_to_ptr.vmem [resolvable:$true] %s44
      %50 = dma.hbm_to_vmem [thread:$0]  %s3, 256, %s45, [#allocation7], 64, 64, 4
    $region17: #{tpu_custom_call.1} parent=1 // pred_fallthru
      _
    // Predicated region
    $region18: #{tpu_custom_call.1} parent=1 // pred_check
      _
    $region19: #{tpu_custom_call.1} parent=1 // pred_check_branch
      %52 = sbr.rel (0) target = $region21
    $region20: #{tpu_custom_call.1} parent=1 // pred_region
      _
    $region21: #{tpu_custom_call.1} parent=1 // pred_fallthru
      _
    // Predicated region
    $region22: #{tpu_custom_call.1} parent=1 // pred_check
      _
    $region23: #{tpu_custom_call.1} parent=1 // pred_check_branch
      %54 = sbr.rel (0) target = $region25
    $region24: #{tpu_custom_call.1} parent=1 // pred_region
      %55 = dma.done [#allocation4], 128
    $region25: #{tpu_custom_call.1} parent=1 // pred_fallthru
      _
    // Predicated region
    $region26: #{tpu_custom_call.1} parent=1 // pred_check
      _
    $region27: #{tpu_custom_call.1} parent=1 // pred_check_branch
      %57 = sbr.rel (0) target = $region29
    $region28: #{tpu_custom_call.1} parent=1 // pred_region
      %58 = dma.done [#allocation7], 128
    $region29: #{tpu_custom_call.1} parent=1 // pred_fallthru
      _
    // Predicated region
    $region30: #{tpu_custom_call.1} parent=1 // pred_check
      _
    $region31: #{tpu_custom_call.1} parent=1 // pred_check_branch
      %60 = sbr.rel (0) target = $region33
    $region32: #{tpu_custom_call.1} parent=1 // pred_region
      %61 = dma.done [#allocation7], 256
    $region33: #{tpu_custom_call.1} parent=1 // pred_fallthru
      _
    %p63 = scmp.eq.s32.totalorder 0, 0
    // Predicated region
    $region34: #{tpu_custom_call.1} parent=1 // pred_check
      %p64 = pneg %p63
    $region35: #{tpu_custom_call.1} parent=1 // pred_check_branch
      %66 = sbr.rel (%p64) target = $region37
    $region36: #{tpu_custom_call.1} parent=1 // pred_region
      %v67 = vld [vmem:[#allocation3] sm:$0xf]
      %v68 = vld [vmem:[#allocation3 + $0x4] sm:$0xf]
      %v69 = vld [vmem:[#allocation6] sm:$0xf]
      %v70 = vld [vmem:[#allocation6 + $0x4] sm:$0xf]
      %v71 = vld [vmem:[%s2] sm:$0x1]
      %v73 = vlaneseq
      %v74 = vshrl.u32 %v73, 7
      %v75 = vsub.s32 0, %v74
      %v76 = vrot.slane %v71, %v75
      %v80 = vunpack.c.l.b16 %v67
      %v81 = vunpack.c.l.b16 %v68
      %v82 = vpack.c.b16 %v81, %v80
      %v85 = vunpack.c.l.b16 %v69
      %v86 = vunpack.c.l.b16 %v70
      %v87 = vpack.c.b16 %v86, %v85
      %vm89 = vcmask 130048
      %v91 = vsel %vm89, %v82, 0
      %93 = vmatprep.subr.bf16.mxu0 0
      %94 = vmatpush1.bf16.msra.mxu0 %v87
      %95 = vmatprep.subr.bf16.mxu0 0
      %96 = vmatpush1.bf16.msra.mxu0 0
      %97 = vmatprep.subr.bf16.mxu0 0
      %98 = vmatpush1.bf16.msra.mxu0 0
      %99 = vmatprep.subr.bf16.mxu0 0
      %100 = vmatpush1.bf16.msra.mxu0 0
      %101 = vmatprep.subr.bf16.mxu0 0
      %102 = vmatpush1.bf16.msra.mxu0 0
      %103 = vmatprep.subr.bf16.mxu0 0
      %104 = vmatpush1.bf16.msra.mxu0 0
      %105 = vmatprep.subr.bf16.mxu0 0
      %106 = vmatpush1.bf16.msra.mxu0 0
      %107 = vmatprep.subr.bf16.mxu0 0
      %108 = vmatpush1.bf16.msra.mxu0 0
      %109 = vmatprep.subr.bf16.mxu0 0
      %110 = vmatpush1.bf16.msra.mxu0 0
      %111 = vmatprep.subr.bf16.mxu0 0
      %112 = vmatpush1.bf16.msra.mxu0 0
      %113 = vmatprep.subr.bf16.mxu0 0
      %114 = vmatpush1.bf16.msra.mxu0 0
      %115 = vmatprep.subr.bf16.mxu0 0
      %116 = vmatpush1.bf16.msra.mxu0 0
      %117 = vmatprep.subr.bf16.mxu0 0
      %118 = vmatpush1.bf16.msra.mxu0 0
      %119 = vmatprep.subr.bf16.mxu0 0
      %120 = vmatpush1.bf16.msra.mxu0 0
      %121 = vmatprep.subr.bf16.mxu0 0
      %122 = vmatpush1.bf16.msra.mxu0 0
      %123 = vmatprep.subr.bf16.mxu0 0
      %124 = vmatpush1.bf16.msra.mxu0 0
      %125 = vmatprep.mubr.bf16.mxu0 0
      %126 = vmatmul.mubr.bf16.gmra.mrb[0].mxu0 %v91
      %v127 = vpop.f32.mrb[0].mxu0
      %v128 = vadd.f32 %v76, %v127
      %v129 = vpop.f32.mrb[0].mxu0
      %v130 = vpop.f32.mrb[0].mxu0
      %v131 = vadd.f32 %v76, %v130
      %v132 = vpop.f32.mrb[0].mxu0
      %133 = vdwg.mxu0
      %v134 = vmax.f32 %v128, 0.0
      %v135 = vmax.f32 %v131, 0.0
      %v136 = vpack.c.bf16 %v135, %v134
      %vm137 = vcmask 261120
      %138 = vst.msk [vmem:[#allocation2] sm:$0xff] %vm137, %v136
    $region37: #{tpu_custom_call.1} parent=1 // pred_fallthru
      _
    %v139 = vld [vmem:[#allocation2] sm:$0xff]
    %v140 = vld [vmem:[#allocation8] sm:$0xf]
    %v141 = vld [vmem:[#allocation8 + $0x4] sm:$0xf]
    %v142 = vld [vmem:[#allocation8 + $0x8] sm:$0xf]
    %v143 = vld [vmem:[#allocation8 + $0xc] sm:$0xf]
    %v144 = vld [vmem:[%s4] sm:$0x1]
    %v146 = vlaneseq
    %v147 = vshrl.u32 %v146, 7
    %v148 = vsub.s32 0, %v147
    %v149 = vrot.slane %v144, %v148
    %v155 = vunpack.c.l.b16 %v140
    %v156 = vunpack.c.l.b16 %v141
    %v157 = vunpack.c.l.b16 %v142
    %v158 = vunpack.c.l.b16 %v143
    %v159 = vpack.c.b16 %v156, %v155
    %v160 = vpack.c.b16 %v158, %v157
    %vm163 = vcmask 261120
    %v165 = vsel %vm163, %v139, 0
    %167 = vmatprep.subr.bf16.mxu0 0
    %168 = vmatpush1.bf16.msra.mxu0 %v159
    %169 = vmatprep.subr.bf16.mxu0 0
    %170 = vmatpush1.bf16.msra.mxu0 %v160
    %171 = vmatprep.subr.bf16.mxu0 0
    %172 = vmatpush1.bf16.msra.mxu0 0
    %173 = vmatprep.subr.bf16.mxu0 0
    %174 = vmatpush1.bf16.msra.mxu0 0
    %175 = vmatprep.subr.bf16.mxu0 0
    %176 = vmatpush1.bf16.msra.mxu0 0
    %177 = vmatprep.subr.bf16.mxu0 0
    %178 = vmatpush1.bf16.msra.mxu0 0
    %179 = vmatprep.subr.bf16.mxu0 0
    %180 = vmatpush1.bf16.msra.mxu0 0
    %181 = vmatprep.subr.bf16.mxu0 0
    %182 = vmatpush1.bf16.msra.mxu0 0
    %183 = vmatprep.subr.bf16.mxu0 0
    %184 = vmatpush1.bf16.msra.mxu0 0
    %185 = vmatprep.subr.bf16.mxu0 0
    %186 = vmatpush1.bf16.msra.mxu0 0
    %187 = vmatprep.subr.bf16.mxu0 0
    %188 = vmatpush1.bf16.msra.mxu0 0
    %189 = vmatprep.subr.bf16.mxu0 0
    %190 = vmatpush1.bf16.msra.mxu0 0
    %191 = vmatprep.subr.bf16.mxu0 0
    %192 = vmatpush1.bf16.msra.mxu0 0
    %193 = vmatprep.subr.bf16.mxu0 0
    %194 = vmatpush1.bf16.msra.mxu0 0
    %195 = vmatprep.subr.bf16.mxu0 0
    %196 = vmatpush1.bf16.msra.mxu0 0
    %197 = vmatprep.subr.bf16.mxu0 0
    %198 = vmatpush1.bf16.msra.mxu0 0
    %199 = vmatprep.mubr.bf16.mxu0 0
    %200 = vmatmul.mubr.bf16.gmra.mrb[0].mxu0 %v165
    %v201 = vpop.f32.mrb[0].mxu0
    %v202 = vadd.f32 %v149, %v201
    %v203 = vpop.f32.mrb[0].mxu0
    %v204 = vpop.f32.mrb[0].mxu0
    %v205 = vadd.f32 %v149, %v204
    %v206 = vpop.f32.mrb[0].mxu0
    %207 = vdwg.mxu0
    %208 = vst [vmem:[#allocation9] sm:$0xff] %v202
    %209 = vst [vmem:[#allocation9 + $0x8] sm:$0xff] %v205
    // Predicated region
    $region38: #{tpu_custom_call.1} parent=1 // pred_check
      _
    $region39: #{tpu_custom_call.1} parent=1 // pred_check_branch
      %211 = sbr.rel (0) target = $region41
    $region40: #{tpu_custom_call.1} parent=1 // pred_region
      %s213 = ssub.s32 256, 256
      %214 = vsyncadd [#allocation5], %s213
      %s215 = sshll.u32 [#allocation9], 4
      %s216 = int_to_ptr.vmem [resolvable:$true] %s215
      %221 = dma.vmem_to_hbm [thread:$0]  %s216, 256, %s5, [#allocation5], 128, 128, 8
    $region41: #{tpu_custom_call.1} parent=1 // pred_fallthru
      _
    // Predicated region
    $region42: #{tpu_custom_call.1} parent=1 // pred_check
      _
    $region43: #{tpu_custom_call.1} parent=1 // pred_check_branch
      %223 = sbr.rel (0) target = $region45
    $region44: #{tpu_custom_call.1} parent=1 // pred_region
      %224 = dma.done [#allocation5], 256
    $region45: #{tpu_custom_call.1} parent=1 // pred_fallthru
      _
    %225 = vsyncpa [#allocation4], 1
    %226 = vsyncpa [#allocation7], 1
    %227 = vsyncpa [#allocation5], 1

</llo_original>
